<compile_context>
chip_gen: v6e
topology: v6e:2x2x1
jax: 0.10.0
libtpu: 0.0.40
codegen_flags: <defaults>
</compile_context>

<pallas_src>
import functools

import jax
import jax.numpy as jnp
from jax.experimental import pallas as pl
from jax.experimental.pallas import tpu as pltpu


def _round_up(x, m):
    return ((x + m - 1) // m) * m


def _label_embed_kernel(labels_ref, drop_ref, table_hbm, out_ref, copy_sems,
                        *, tb, num_classes, num_rows):
    # labels_ref / drop_ref: (B_pad,) int32 SMEM scalar-prefetch refs.
    # table_hbm:             (V, H) embedding table, left in HBM (pl.ANY).
    # out_ref:               (TB, H) VMEM output block for this batch block.
    # copy_sems:             (TB,) DMA semaphores, one per in-flight gather.
    i = pl.program_id(0)

    def eff_row(r):
        b = i * tb + r
        lab = labels_ref[b]
        # CFG token_drop on the scalar core: drop -> CFG token <num_classes>.
        eff = jnp.where(drop_ref[b] == 1, jnp.int32(num_classes), lab)
        # Safety clamp so a corrupt label can never DMA outside the table.
        # (Invalid CFG usage is rejected loudly in the Python wrapper.)
        return jnp.clip(eff, 0, num_rows - 1)

    # Start all TB gather DMAs: HBM table row -> row r of the VMEM out block.
    @pl.loop(0, tb)
    def _start(r):
        pltpu.make_async_copy(table_hbm.at[eff_row(r)], out_ref.at[r],
                              copy_sems.at[r]).start()

    # Wait for all of them (source slice is irrelevant for the wait; only the
    # destination shape / semaphore matter).
    @pl.loop(0, tb)
    def _wait(r):
        pltpu.make_async_copy(table_hbm.at[0], out_ref.at[r],
                              copy_sems.at[r]).wait()


def label_embed_pallas(labels, drop_ids, table, num_classes, *, max_block_b=128):
    """labels: (B,) int; drop_ids: (B,) int (1 => replace with CFG token);
    table: (V, H) embedding table.
    Returns (B, 1, H) == embedding_table(token_drop(labels)).unsqueeze(1)."""
    B = labels.shape[0]
    V, H = table.shape

    # TB rows per grid step: multiple of 8 (sublane-dense output block),
    # capped at max_block_b.  Pad B up to a TB multiple; pad rows gather row 0
    # and are sliced off below.
    tb = min(max_block_b, _round_up(B, 8))
    b_pad = _round_up(B, tb)
    num_blocks = b_pad // tb

    labels = labels.astype(jnp.int32)
    drop_ids = drop_ids.astype(jnp.int32)
    if b_pad != B:
        labels = jnp.pad(labels, (0, b_pad - B))
        drop_ids = jnp.pad(drop_ids, (0, b_pad - B))

    kernel = functools.partial(
        _label_embed_kernel, tb=tb, num_classes=num_classes, num_rows=V)

    grid_spec = pltpu.PrefetchScalarGridSpec(
        num_scalar_prefetch=2,
        grid=(num_blocks,),
        in_specs=[pl.BlockSpec(memory_space=pl.ANY)],        # table stays in HBM
        out_specs=pl.BlockSpec((tb, H), lambda i, labels_sref, drop_sref: (i, 0)),
        scratch_shapes=[pltpu.SemaphoreType.DMA((tb,))],
    )

    itemsize = jnp.dtype(table.dtype).itemsize
    out = pl.pallas_call(
        kernel,
        out_shape=jax.ShapeDtypeStruct((b_pad, H), table.dtype),
        grid_spec=grid_spec,
        compiler_params=pltpu.CompilerParams(
            dimension_semantics=("parallel",)),
        cost_estimate=pl.CostEstimate(
            flops=0, transcendentals=0,
            bytes_accessed=2 * b_pad * H * itemsize),
    )(labels, drop_ids, table)

    # torch: embedding_table(labels).unsqueeze(1)  -> (B, 1, H)
    return out[:B][:, None, :]


class LabelEmbedder:
    """JAX/Pallas port of the PyTorch LabelEmbedder (CFG label dropout + embed)."""

    def __init__(self, num_classes, hidden_size, dropout_prob, key,
                 dtype=jnp.float32):
        use_cfg_embedding = int(dropout_prob > 0)
        self.num_classes = num_classes
        self.dropout_prob = dropout_prob
        # nn.Embedding default init: N(0, 1).  Keep hidden_size a multiple of
        # 128 for lane-aligned row DMAs (pad upstream if the model's H isn't);
        # cast `dtype` to bf16 if the downstream model runs in bf16.
        self.table = jax.random.normal(
            key, (num_classes + use_cfg_embedding, hidden_size), dtype=dtype)

    def __call__(self, labels, train, force_drop_ids=None, rng=None):
        use_dropout = self.dropout_prob > 0
        B = labels.shape[0]
        apply_drop = (train and use_dropout) or (force_drop_ids is not None)
        if apply_drop:
            if not use_dropout:
                # PyTorch would raise an out-of-range index error when the CFG
                # token <num_classes> is looked up with no CFG row; fail loudly
                # instead of silently clamping to a wrong embedding.
                raise ValueError(
                    "force_drop_ids requires dropout_prob > 0 (no CFG row).")
            if force_drop_ids is None:
                if rng is None:
                    raise ValueError("rng is required for train-time label dropout.")
                # torch.rand(...) < dropout_prob equivalent (host-side RNG).
                drop_ids = (jax.random.uniform(rng, (B,)) < self.dropout_prob
                            ).astype(jnp.int32)
            else:
                drop_ids = (force_drop_ids == 1).astype(jnp.int32)
        else:
            drop_ids = jnp.zeros((B,), jnp.int32)
        return label_embed_pallas(labels, drop_ids, self.table, self.num_classes)


if __name__ == "__main__":
    key = jax.random.PRNGKey(0)
    k_table, k_labels = jax.random.split(key)

    num_classes = 16
    hidden_size = 128
    dropout_prob = 0.1
    batch = 8

    embedder = LabelEmbedder(num_classes, hidden_size, dropout_prob, k_table)

    labels = jax.random.randint(k_labels, (batch,), 0, num_classes, dtype=jnp.int32)
    # Deterministic CFG drop pattern (forward with force_drop_ids != None).
    force_drop_ids = jnp.array([0, 1, 0, 0, 1, 0, 0, 1], dtype=jnp.int32)

    out = jax.block_until_ready(
        embedder(labels, train=True, force_drop_ids=force_drop_ids))

    # Pure-JAX reference: where-drop + table lookup + unsqueeze(1).
    ref_labels = jnp.where(force_drop_ids == 1, num_classes, labels)
    ref = embedder.table[ref_labels][:, None, :]
    assert out.shape == (batch, 1, hidden_size), out.shape
    assert out.dtype == jnp.float32
    assert jnp.array_equal(out, ref)  # pure row copy -> bit exact

    # Eval path (train=False, no CFG drop) at a batch that is NOT a multiple of
    # 8, exercising the pad/slice path.
    out_eval = jax.block_until_ready(embedder(labels[:5], train=False))
    ref_eval = embedder.table[labels[:5]][:, None, :]
    assert out_eval.shape == (5, 1, hidden_size)
    assert jnp.array_equal(out_eval, ref_eval)

    print("KERNEL_OK")
</pallas_src>

<mosaic_0001>
module attributes {stable_mosaic.version = 11 : i64} {
  func.func @_label_embed_kernel(%arg0: i32, %arg1: memref<8xi32, #tpu.memory_space<smem>>, %arg2: memref<8xi32, #tpu.memory_space<smem>>, %arg3: memref<17x128xf32, #tpu.memory_space<any>>, %arg4: memref<8x128xf32, #tpu.memory_space<vmem>>, %arg5: memref<8x!tpu.dma_semaphore, #tpu.memory_space<semaphore_mem>>) attributes {dimension_semantics = [#tpu.dimension_semantics<parallel>], iteration_bounds = array<i64: 1>, scalar_prefetch = 2 : i64, scratch_operands = 1 : i64, tpu.core_type = #tpu.core_type<tc>, window_params = [{}, {transform_indices = @transform_1, window_bounds = array<i64: 8, 128>}]} {
    %c0_i32 = arith.constant 0 : i32
    %c8_i32 = arith.constant 8 : i32
    %0 = arith.addi %c0_i32, %c8_i32 : i32
    %c1_i32 = arith.constant 1 : i32
    scf.for %arg6 = %c0_i32 to %0 step %c1_i32  : i32 {
      %c1_i32_5 = arith.constant 1 : i32
      %2 = arith.muli %arg6, %c1_i32_5 : i32
      %c0_i32_6 = arith.constant 0 : i32
      %3 = arith.addi %c0_i32_6, %2 : i32
      %c8_i32_7 = arith.constant 8 : i32
      %4 = arith.muli %arg0, %c8_i32_7 : i32
      %5 = arith.addi %4, %3 : i32
      %6 = arith.index_cast %5 : i32 to index
      %7 = memref.load %arg1[%6] : memref<8xi32, #tpu.memory_space<smem>>
      %8 = arith.index_cast %5 : i32 to index
      %9 = memref.load %arg2[%8] : memref<8xi32, #tpu.memory_space<smem>>
      %c1_i32_8 = arith.constant 1 : i32
      %10 = arith.cmpi eq, %9, %c1_i32_8 : i32
      %c16_i32 = arith.constant 16 : i32
      %11 = arith.select %10, %c16_i32, %7 : i32
      %c0_i32_9 = arith.constant 0 : i32
      %c16_i32_10 = arith.constant 16 : i32
      %12 = arith.maxsi %c0_i32_9, %11 : i32
      %13 = arith.minsi %c16_i32_10, %12 : i32
      %c0_i32_11 = arith.constant 0 : i32
      %14 = tpu.memref_slice %arg3[%13, %c0_i32_11] : memref<17x128xf32, #tpu.memory_space<any>> -> memref<1x128xf32, #tpu.memory_space<any>>
      %15 = tpu.memref_squeeze %14 : memref<1x128xf32, #tpu.memory_space<any>> -> memref<128xf32, #tpu.memory_space<any>>
      %c0_i32_12 = arith.constant 0 : i32
      %16 = tpu.memref_slice %arg4[%3, %c0_i32_12] : memref<8x128xf32, #tpu.memory_space<vmem>> -> memref<1x128xf32, #tpu.memory_space<vmem>>
      %17 = tpu.memref_squeeze %16 : memref<1x128xf32, #tpu.memory_space<vmem>> -> memref<128xf32, #tpu.memory_space<vmem>>
      %18 = tpu.memref_slice %arg5[%3] : memref<8x!tpu.dma_semaphore, #tpu.memory_space<semaphore_mem>> -> memref<1x!tpu.dma_semaphore, #tpu.memory_space<semaphore_mem>>
      %19 = tpu.memref_squeeze %18 : memref<1x!tpu.dma_semaphore, #tpu.memory_space<semaphore_mem>> -> memref<!tpu.dma_semaphore, #tpu.memory_space<semaphore_mem>>
      tpu.enqueue_dma source(%15 : memref<128xf32, #tpu.memory_space<any>>) target(%17 : memref<128xf32, #tpu.memory_space<vmem>>) target_semaphore(%19 : memref<!tpu.dma_semaphore, #tpu.memory_space<semaphore_mem>>)
    }
    %c8_i32_0 = arith.constant 8 : i32
    %c0_i32_1 = arith.constant 0 : i32
    %c8_i32_2 = arith.constant 8 : i32
    %1 = arith.addi %c0_i32_1, %c8_i32_2 : i32
    %c1_i32_3 = arith.constant 1 : i32
    scf.for %arg6 = %c0_i32_1 to %1 step %c1_i32_3  : i32 {
      %c1_i32_5 = arith.constant 1 : i32
      %2 = arith.muli %arg6, %c1_i32_5 : i32
      %c0_i32_6 = arith.constant 0 : i32
      %3 = arith.addi %c0_i32_6, %2 : i32
      %c0_i32_7 = arith.constant 0 : i32
      %c0_i32_8 = arith.constant 0 : i32
      %4 = tpu.memref_slice %arg3[%c0_i32_7, %c0_i32_8] : memref<17x128xf32, #tpu.memory_space<any>> -> memref<1x128xf32, #tpu.memory_space<any>>
      %5 = tpu.memref_squeeze %4 : memref<1x128xf32, #tpu.memory_space<any>> -> memref<128xf32, #tpu.memory_space<any>>
      %c0_i32_9 = arith.constant 0 : i32
      %6 = tpu.memref_slice %arg4[%3, %c0_i32_9] : memref<8x128xf32, #tpu.memory_space<vmem>> -> memref<1x128xf32, #tpu.memory_space<vmem>>
      %7 = tpu.memref_squeeze %6 : memref<1x128xf32, #tpu.memory_space<vmem>> -> memref<128xf32, #tpu.memory_space<vmem>>
      %8 = tpu.memref_slice %arg5[%3] : memref<8x!tpu.dma_semaphore, #tpu.memory_space<semaphore_mem>> -> memref<1x!tpu.dma_semaphore, #tpu.memory_space<semaphore_mem>>
      %9 = tpu.memref_squeeze %8 : memref<1x!tpu.dma_semaphore, #tpu.memory_space<semaphore_mem>> -> memref<!tpu.dma_semaphore, #tpu.memory_space<semaphore_mem>>
      tpu.wait_dma2 semaphore(%9 : memref<!tpu.dma_semaphore, #tpu.memory_space<semaphore_mem>>) src(%5 : memref<128xf32, #tpu.memory_space<any>>) dst(%7 : memref<128xf32, #tpu.memory_space<vmem>>)
    }
    %c8_i32_4 = arith.constant 8 : i32
    return
  }
  func.func @transform_1(%arg0: i32, %arg1: memref<8xi32, #tpu.memory_space<smem>>, %arg2: memref<8xi32, #tpu.memory_space<smem>>) -> (i32, i32) {
    %c0_i32 = arith.constant 0 : i32
    %c0_i32_0 = arith.constant 0 : i32
    return %arg0, %c0_i32 : i32, i32
  }
}

</mosaic_0001>

<llo_original>
// kernel: tpu_custom_call.1
$region0: #{tpu_custom_call.1}
  #allocation0 [shape = 'u32[]', space=smem, size = 0x4, offset = 0x4, fixed_abs, tag = 'smem constant byte address 0x4 - core index']
  #allocation1 [shape = 'u32[144,128]{1,0:T(1,128)}', space=vmem, size = 0x12000, scoped, tag = 'internal scratch']
  #allocation2 [shape = 's32[8]{0}', space=sflag, size = 0x20, scoped, tag = 'scratch operand']
  #allocation3 [shape = 's32[1]{0}', space=sflag, size = 0x4, scoped, tag = 'scoped memory for tpu_custom_call.1']
  #allocation4 [shape = 'u8[512]{0}', space=smem, size = 0x200, scoped, tag = 'prefetched SMEM operand 0']
  #allocation5 [shape = 'u8[512]{0}', space=smem, size = 0x200, scoped, tag = 'prefetched SMEM operand 1']
  #allocation8 [shape = 's32[]', space=sflag, size = 0x4, offset = 0, fixed_abs, tag = 'sflag constant byte address 0x0 - dummy sync flag']
  #allocation9 [shape = 's32[]', space=sflag, size = 0x4, offset = 0, fixed_abs, tag = 'sflag constant byte address 0x0 - dummy sync flag']
  #allocation10 [shape = 'u32[]', space=smem, size = 0x4, offset = 0x44, fixed_abs, tag = 'smem constant byte address 0x44 - assertion arg 0']
  #allocation11 [shape = 'u32[]', space=smem, size = 0x4, offset = 0x48, fixed_abs, tag = 'smem constant byte address 0x48 - assertion arg 1']
  %s0 = inlined_call_operand.hbm [shape: s32[8], index: 0, kind: input, shape index: {}]
  %s1 = inlined_call_operand.vmem [shape: s32[8], index: 1, kind: input, shape index: {}]
  %s2 = inlined_call_operand.hbm [shape: f32[17,128], index: 2, kind: input, shape index: {}]
  %s3 = inlined_call_operand.hbm [shape: f32[8,128], index: 3, kind: output, shape index: {}]
  %s4 = sld [smem:[#allocation0]]
  $region28: #{tpu_custom_call.1} parent=0
    _
  %s6 = ssub.s32 1, %s4
  %s7 = scalar_select 0, %s6, %s4
  %9 = dma.hbm_to_smem %s0, 16, [#allocation4], [#allocation3]
  %s10 = sshll.u32 %s1, 4
  %s11 = int_to_ptr.vmem [resolvable:$true] %s10
  %13 = dma.vmem_to_smem %s11, 16, [#allocation5], [#allocation3]
  %14 = dma.done [#allocation3], 32
  %15 = sfence
  $region1: #{tpu_custom_call.1} parent=0
    #allocation6 [shape = 'u8[4096]{0}', space=vmem, size = 0x1000, scoped, tag = 'output window, operand 0, single buffered']
    #allocation7 [shape = 's32[1]{0}', space=sflag, size = 0x4, scoped, tag = 'scoped memory for tpu_custom_call.1']
    %16 = vsyncpa [#allocation7], 0
    loop: start=0, step=1, limit=8
    $region2: #{tpu_custom_call.1} parent=1 // loop_pre_header
      _
    $region3: #{tpu_custom_call.1} parent=1 // loop_header
      %s18 = sphi 0, %s22
      %p19 = scmp.ge.s32.totalorder %s18, 8
    $region4: #{tpu_custom_call.1} parent=1 // loop_header_branch
      %21 = sbr.rel (%p19) target = $region8
    $region5: #{tpu_custom_call.1} parent=1 // loop_body
      %s23 = smul.u32 0, 8
      %s24 = sadd.s32 %s23, %s18
      %s25 = sld [smem:[#allocation4 + %s24]]
      %s26 = sld [smem:[#allocation5 + %s24]]
      %p27 = scmp.eq.s32.totalorder %s26, 1
      %s28 = scalar_select %p27, 16, %s25
      %p29 = scmp.gt.s32.totalorder %s28, 0
      %s30 = scalar_select %p29, %s28, 0
      %p31 = scmp.lt.s32.totalorder %s30, 16
      %s32 = scalar_select %p31, %s30, 16
      %s33 = smul.addr %s32, 16
      %s34 = scalar_lea.hbm %s2, %s33
      %s35 = scalar_lea.vmem [#allocation6], %s18
      %s36 = scalar_lea.sflag [#allocation2], %s18
      // Predicated region
      $region9: #{tpu_custom_call.1} parent=5 // pred_check
        _
      $region10: #{tpu_custom_call.1} parent=5 // pred_check_branch
        %38 = sbr.rel target = $region12
      $region11: #{tpu_custom_call.1} parent=5 // pred_region
        %39 = sst [smem:[#allocation10]] [#allocation9]
        %40 = sst [smem:[#allocation11]] [#allocation8]
      $region12: #{tpu_custom_call.1} parent=5 // pred_fallthru
        _
      %42 = shalt.err (0)
      %s44 = sshll.u32 %s35, 4
      %s45 = int_to_ptr.vmem [resolvable:$true] %s44
      %47 = dma.hbm_to_vmem [thread:$0]  %s34, 16, %s45, %s36
    $region6: #{tpu_custom_call.1} parent=1 // loop_footer
      %s22 = sadd.s32 1, %s18
    $region7: #{tpu_custom_call.1} parent=1 // loop_footer_branch
      %17 = sbr.rel target = $region3
    $region8: #{tpu_custom_call.1} parent=1 // loop_exit
      _
    loop: start=0, step=1, limit=8
    $region13: #{tpu_custom_call.1} parent=1 // loop_pre_header
      _
    $region14: #{tpu_custom_call.1} parent=1 // loop_header
      %s49 = sphi 0, %s53
      %p50 = scmp.ge.s32.totalorder %s49, 8
    $region15: #{tpu_custom_call.1} parent=1 // loop_header_branch
      %52 = sbr.rel (%p50) target = $region19
    $region16: #{tpu_custom_call.1} parent=1 // loop_body
      %s54 = scalar_lea.sflag [#allocation2], %s49
      %56 = dma.done %s54, 16
    $region17: #{tpu_custom_call.1} parent=1 // loop_footer
      %s53 = sadd.s32 1, %s49
    $region18: #{tpu_custom_call.1} parent=1 // loop_footer_branch
      %48 = sbr.rel target = $region14
    $region19: #{tpu_custom_call.1} parent=1 // loop_exit
      _
    // Predicated region
    $region20: #{tpu_custom_call.1} parent=1 // pred_check
      _
    $region21: #{tpu_custom_call.1} parent=1 // pred_check_branch
      %58 = sbr.rel (0) target = $region23
    $region22: #{tpu_custom_call.1} parent=1 // pred_region
      %s60 = ssub.s32 128, 128
      %61 = vsyncadd [#allocation7], %s60
      %s63 = sshll.u32 [#allocation6], 4
      %s64 = int_to_ptr.vmem [resolvable:$true] %s63
      %66 = dma.vmem_to_hbm [thread:$0]  %s64, 128, %s3, [#allocation7]
    $region23: #{tpu_custom_call.1} parent=1 // pred_fallthru
      _
    // Predicated region
    $region24: #{tpu_custom_call.1} parent=1 // pred_check
      _
    $region25: #{tpu_custom_call.1} parent=1 // pred_check_branch
      %68 = sbr.rel (0) target = $region27
    $region26: #{tpu_custom_call.1} parent=1 // pred_region
      %69 = dma.done [#allocation7], 128
    $region27: #{tpu_custom_call.1} parent=1 // pred_fallthru
      _
    %70 = vsyncpa [#allocation7], 1
  %71 = vsyncmov [#allocation2]
  %s72 = vpop.sfrf %71
  %p73 = scmp.eq.s32.totalorder %s72, 0
  %p74 = pneg %p73
  %76 = shalt.err (%p74)
  %s77 = scalar_lea.sflag [#allocation2], 1
  %78 = vsyncmov %s77
  %s79 = vpop.sfrf %78
  %p80 = scmp.eq.s32.totalorder %s79, 0
  %p81 = pneg %p80
  %83 = shalt.err (%p81)
  %s84 = scalar_lea.sflag [#allocation2], 2
  %85 = vsyncmov %s84
  %s86 = vpop.sfrf %85
  %p87 = scmp.eq.s32.totalorder %s86, 0
  %p88 = pneg %p87
  %90 = shalt.err (%p88)
  %s91 = scalar_lea.sflag [#allocation2], 3
  %92 = vsyncmov %s91
  %s93 = vpop.sfrf %92
  %p94 = scmp.eq.s32.totalorder %s93, 0
  %p95 = pneg %p94
  %97 = shalt.err (%p95)
  %s98 = scalar_lea.sflag [#allocation2], 4
  %99 = vsyncmov %s98
  %s100 = vpop.sfrf %99
  %p101 = scmp.eq.s32.totalorder %s100, 0
  %p102 = pneg %p101
  %104 = shalt.err (%p102)
  %s105 = scalar_lea.sflag [#allocation2], 5
  %106 = vsyncmov %s105
  %s107 = vpop.sfrf %106
  %p108 = scmp.eq.s32.totalorder %s107, 0
  %p109 = pneg %p108
  %111 = shalt.err (%p109)
  %s112 = scalar_lea.sflag [#allocation2], 6
  %113 = vsyncmov %s112
  %s114 = vpop.sfrf %113
  %p115 = scmp.eq.s32.totalorder %s114, 0
  %p116 = pneg %p115
  %118 = shalt.err (%p116)
  %s119 = scalar_lea.sflag [#allocation2], 7
  %120 = vsyncmov %s119
  %s121 = vpop.sfrf %120
  %p122 = scmp.eq.s32.totalorder %s121, 0
  %p123 = pneg %p122
  %125 = shalt.err (%p123)

</llo_original>
